<compile_context>
chip_gen: v6e
topology: v6e:2x2x1
jax: 0.10.0
libtpu: 0.0.40
codegen_flags: <defaults>
</compile_context>

<pallas_src>
import jax
import jax.numpy as jnp
from jax.experimental import pallas as pl
from jax.experimental.pallas import tpu as pltpu


_VMEM_CAP_BYTES = 48 * 1024 * 1024  # v7x-safe (64 MiB physical, leave headroom)


def _round_up(x, m):
    return ((x + m - 1) // m) * m


def _lane_pad(n):
    return _round_up(n, 128)


def _sublane_pad(n):
    return _round_up(n, 8)


def _mel_postnet_kernel(x_ref, eps_ref,
                        w_mu_ref, w_lv_ref, b_mu_ref, b_lv_ref,
                        wd0_ref, wd1_ref, wd2_ref,
                        out_ref, mu_ref, lv_ref):
    x = x_ref[...]                                                        # (TM, idim)

    # before_outs_and_logvar_l split into lane-aligned mu / logvar halves.
    mu = jnp.dot(x, w_mu_ref[...], preferred_element_type=jnp.float32) + b_mu_ref[...]
    logvar = jnp.dot(x, w_lv_ref[...], preferred_element_type=jnp.float32) + b_lv_ref[...]

    # reparameterize: eps * exp(0.5*logvar) + mu   (temp = 1.0)
    z = eps_ref[...] * jnp.exp(0.5 * logvar) + mu                         # (TM, odim)

    # vae_decoder (dropout == identity in eval mode), all bias=False.
    a = jnp.maximum(jnp.dot(z, wd0_ref[...], preferred_element_type=jnp.float32), 0.0)
    a = jnp.maximum(jnp.dot(a, wd1_ref[...], preferred_element_type=jnp.float32), 0.0)
    d = jnp.dot(a, wd2_ref[...], preferred_element_type=jnp.float32)      # (TM, odim)

    out_ref[...] = (z + d).astype(out_ref.dtype)
    mu_ref[...] = mu.astype(mu_ref.dtype)
    lv_ref[...] = logvar.astype(lv_ref.dtype)


def _vmem_estimate_bytes(tile_m, idim, odim, n_units, itemsize=4):
    """VMEM footprint estimate using real (8,128)-padded layouts."""
    # Streamed tiles (x, eps, 3 outputs), double-buffered by the BlockSpec pipeline.
    streamed = 2 * tile_m * (_lane_pad(idim) + 4 * _lane_pad(odim)) * itemsize
    # Resident weights/biases (constant index_map; count x2 for pipeline buffers).
    weights = 2 * (
        2 * _sublane_pad(idim) * _lane_pad(odim)            # w_mu, w_lv
        + 2 * _sublane_pad(1) * _lane_pad(odim)              # b_mu, b_lv
        + _sublane_pad(odim) * _lane_pad(n_units)            # w_d0
        + _sublane_pad(n_units) * _lane_pad(n_units)         # w_d1
        + _sublane_pad(n_units) * _lane_pad(odim)            # w_d2
    ) * itemsize
    # In-kernel intermediates that may spill to VMEM at large tile_m
    # (mu, logvar, z, two hidden activations, d).
    live = tile_m * (4 * _lane_pad(odim) + 2 * _lane_pad(n_units)) * itemsize
    return int((streamed + weights + live) * 1.25)           # ~25% headroom


def mel_postnet_forward(x, eps, params, *, tile_m=4096):
    """x: (B, T, idim) float32, eps: (B, T, odim) float32 ~ N(0,1)."""
    B, T, idim = x.shape
    odim = eps.shape[-1]
    n_units = params["w_d1"].shape[0]
    M = B * T

    # Row tile: multiple of 8 (sublane), no larger than (padded) M.
    tile_m = max(8, min(tile_m, _round_up(M, 8)))
    tile_m = _round_up(tile_m, 8)
    # Keep >= 2 grid steps when M allows (lets v7x split across both TCs).
    if M > 8 and pl.cdiv(M, tile_m) < 2:
        tile_m = max(8, _round_up(pl.cdiv(M, 2), 8))
    # Shrink the tile if the padded-layout VMEM estimate would blow the cap.
    while tile_m > 512 and _vmem_estimate_bytes(tile_m, idim, odim, n_units) > _VMEM_CAP_BYTES:
        tile_m = max(8, _round_up(tile_m // 2, 8))

    grid = (pl.cdiv(M, tile_m),)  # ragged last block handled by Pallas (masked writes)

    vmem_limit = min(_VMEM_CAP_BYTES,
                     max(8 * 1024 * 1024,
                         _vmem_estimate_bytes(tile_m, idim, odim, n_units)))

    # Free reshapes (collapse leading dims); no jnp.pad -> no extra HBM copies.
    x2 = x.reshape(M, idim)
    eps2 = eps.reshape(M, odim)

    # Split the fused projection into lane-aligned mu/logvar halves (static, tiny).
    w_full = params["w_full"]
    b_full = params["b_full"]
    w_mu, w_lv = w_full[:, :odim], w_full[:, odim:]
    b_mu, b_lv = b_full[:, :odim], b_full[:, odim:]

    in_specs = [
        pl.BlockSpec((tile_m, idim), lambda i: (i, 0)),          # x tile (streamed)
        pl.BlockSpec((tile_m, odim), lambda i: (i, 0)),          # eps tile (streamed)
        pl.BlockSpec((idim, odim), lambda i: (0, 0)),            # w_mu (resident)
        pl.BlockSpec((idim, odim), lambda i: (0, 0)),            # w_lv (resident)
        pl.BlockSpec((1, odim), lambda i: (0, 0)),               # b_mu (resident)
        pl.BlockSpec((1, odim), lambda i: (0, 0)),               # b_lv (resident)
        pl.BlockSpec((odim, n_units), lambda i: (0, 0)),         # decoder W0 (resident)
        pl.BlockSpec((n_units, n_units), lambda i: (0, 0)),      # decoder W1 (resident)
        pl.BlockSpec((n_units, odim), lambda i: (0, 0)),         # decoder W2 (resident)
    ]
    out_specs = (
        pl.BlockSpec((tile_m, odim), lambda i: (i, 0)),          # out
        pl.BlockSpec((tile_m, odim), lambda i: (i, 0)),          # mu
        pl.BlockSpec((tile_m, odim), lambda i: (i, 0)),          # logvar
    )
    out_shape = (
        jax.ShapeDtypeStruct((M, odim), jnp.float32),
        jax.ShapeDtypeStruct((M, odim), jnp.float32),
        jax.ShapeDtypeStruct((M, odim), jnp.float32),
    )

    cost = pl.CostEstimate(
        flops=2 * M * (2 * idim * odim + odim * n_units
                       + n_units * n_units + n_units * odim),
        transcendentals=M * odim,
        bytes_accessed=4 * (M * (idim + 4 * odim)
                            + 2 * idim * odim + 2 * odim
                            + odim * n_units + n_units * n_units + n_units * odim),
    )

    out, mu, logvar = pl.pallas_call(
        _mel_postnet_kernel,
        out_shape=out_shape,
        grid=grid,
        in_specs=in_specs,
        out_specs=out_specs,
        compiler_params=pltpu.CompilerParams(
            dimension_semantics=("parallel",),
            vmem_limit_bytes=vmem_limit,
        ),
        cost_estimate=cost,
    )(x2, eps2, w_mu, w_lv, b_mu, b_lv,
      params["w_d0"], params["w_d1"], params["w_d2"])

    return (out.reshape(B, T, odim),
            mu.reshape(B, T, odim),
            logvar.reshape(B, T, odim))


def init_params(key, idim, odim, n_units):
    ks = jax.random.split(key, 5)
    scale = 0.05
    # Linear(idim -> 2*odim) stored [in, out] (== PyTorch x @ W.T with W [out, in]).
    return {
        "w_full": scale * jax.random.normal(ks[0], (idim, 2 * odim), jnp.float32),
        "b_full": scale * jax.random.normal(ks[1], (1, 2 * odim), jnp.float32),
        "w_d0": scale * jax.random.normal(ks[2], (odim, n_units), jnp.float32),
        "w_d1": scale * jax.random.normal(ks[3], (n_units, n_units), jnp.float32),
        "w_d2": scale * jax.random.normal(ks[4], (n_units, odim), jnp.float32),
    }


if __name__ == "__main__":
    # Small shapes consistent with the module (idim -> 2*odim linear, etc.)
    B, T, idim, odim, n_units = 2, 8, 32, 16, 32

    root = jax.random.PRNGKey(0)
    k_x, k_eps, k_p = jax.random.split(root, 3)

    x = jax.random.normal(k_x, (B, T, idim), jnp.float32)
    eps = jax.random.normal(k_eps, (B, T, odim), jnp.float32)  # randn_like(std)
    params = init_params(k_p, idim, odim, n_units)

    out, mu, logvar = mel_postnet_forward(x, eps, params)
    jax.block_until_ready((out, mu, logvar))

    # Pure-JAX reference check
    h = x @ params["w_full"] + params["b_full"][0]
    mu_r, lv_r = h[..., :odim], h[..., odim:]
    z_r = eps * jnp.exp(0.5 * lv_r) + mu_r
    d_r = jnp.maximum(z_r @ params["w_d0"], 0.0)
    d_r = jnp.maximum(d_r @ params["w_d1"], 0.0)
    out_r = z_r + d_r @ params["w_d2"]
    assert jnp.allclose(out, out_r, atol=1e-5)
    assert jnp.allclose(mu, mu_r, atol=1e-5)
    assert jnp.allclose(logvar, lv_r, atol=1e-5)

    print("KERNEL_OK")
</pallas_src>

<mosaic_0001>
module attributes {stable_mosaic.version = 11 : i64} {
  func.func @_mel_postnet_kernel(%arg0: i32, %arg1: memref<8x32xf32, #tpu.memory_space<vmem>>, %arg2: memref<8x16xf32, #tpu.memory_space<vmem>>, %arg3: memref<32x16xf32, #tpu.memory_space<vmem>>, %arg4: memref<32x16xf32, #tpu.memory_space<vmem>>, %arg5: memref<1x16xf32, #tpu.memory_space<vmem>>, %arg6: memref<1x16xf32, #tpu.memory_space<vmem>>, %arg7: memref<16x32xf32, #tpu.memory_space<vmem>>, %arg8: memref<32x32xf32, #tpu.memory_space<vmem>>, %arg9: memref<32x16xf32, #tpu.memory_space<vmem>>, %arg10: memref<8x16xf32, #tpu.memory_space<vmem>>, %arg11: memref<8x16xf32, #tpu.memory_space<vmem>>, %arg12: memref<8x16xf32, #tpu.memory_space<vmem>>) attributes {dimension_semantics = [#tpu.dimension_semantics<parallel>], iteration_bounds = array<i64: 2>, scalar_prefetch = 0 : i64, scratch_operands = 0 : i64, tpu.core_type = #tpu.core_type<tc>, window_params = [{transform_indices = @transform_0, window_bounds = array<i64: 8, 32>}, {transform_indices = @transform_1, window_bounds = array<i64: 8, 16>}, {pipeline_mode = #tpu.pipeline_mode<synchronous>, transform_indices = @transform_2, window_bounds = array<i64: 32, 16>}, {pipeline_mode = #tpu.pipeline_mode<synchronous>, transform_indices = @transform_3, window_bounds = array<i64: 32, 16>}, {pipeline_mode = #tpu.pipeline_mode<synchronous>, transform_indices = @transform_4, window_bounds = array<i64: 1, 16>}, {pipeline_mode = #tpu.pipeline_mode<synchronous>, transform_indices = @transform_5, window_bounds = array<i64: 1, 16>}, {pipeline_mode = #tpu.pipeline_mode<synchronous>, transform_indices = @transform_6, window_bounds = array<i64: 16, 32>}, {pipeline_mode = #tpu.pipeline_mode<synchronous>, transform_indices = @transform_7, window_bounds = array<i64: 32, 32>}, {pipeline_mode = #tpu.pipeline_mode<synchronous>, transform_indices = @transform_8, window_bounds = array<i64: 32, 16>}, {transform_indices = @transform_9, window_bounds = array<i64: 8, 16>}, {transform_indices = @transform_10, window_bounds = array<i64: 8, 16>}, {transform_indices = @transform_11, window_bounds = array<i64: 8, 16>}]} {
    %c0 = arith.constant 0 : index
    %c0_0 = arith.constant 0 : index
    %0 = vector.load %arg1[%c0, %c0_0] : memref<8x32xf32, #tpu.memory_space<vmem>>, vector<8x32xf32>
    %c0_1 = arith.constant 0 : index
    %c0_2 = arith.constant 0 : index
    %1 = vector.load %arg3[%c0_1, %c0_2] : memref<32x16xf32, #tpu.memory_space<vmem>>, vector<32x16xf32>
    %cst = arith.constant dense<0.000000e+00> : vector<8x16xf32>
    %2 = tpu.matmul %0, %1, %cst {dimension_numbers = #tpu.dot_dimension_numbers<[1], [0], [0], [1], [0, 0, 1, 1], [], []>} : vector<8x32xf32>, vector<32x16xf32>, vector<8x16xf32> -> vector<8x16xf32>
    %c0_3 = arith.constant 0 : index
    %c0_4 = arith.constant 0 : index
    %3 = vector.load %arg5[%c0_3, %c0_4] : memref<1x16xf32, #tpu.memory_space<vmem>>, vector<1x16xf32>
    %4 = vector.broadcast %3 : vector<1x16xf32> to vector<8x16xf32>
    %5 = arith.addf %2, %4 : vector<8x16xf32>
    %c0_5 = arith.constant 0 : index
    %c0_6 = arith.constant 0 : index
    %6 = vector.load %arg4[%c0_5, %c0_6] : memref<32x16xf32, #tpu.memory_space<vmem>>, vector<32x16xf32>
    %cst_7 = arith.constant dense<0.000000e+00> : vector<8x16xf32>
    %7 = tpu.matmul %0, %6, %cst_7 {dimension_numbers = #tpu.dot_dimension_numbers<[1], [0], [0], [1], [0, 0, 1, 1], [], []>} : vector<8x32xf32>, vector<32x16xf32>, vector<8x16xf32> -> vector<8x16xf32>
    %c0_8 = arith.constant 0 : index
    %c0_9 = arith.constant 0 : index
    %8 = vector.load %arg6[%c0_8, %c0_9] : memref<1x16xf32, #tpu.memory_space<vmem>>, vector<1x16xf32>
    %9 = vector.broadcast %8 : vector<1x16xf32> to vector<8x16xf32>
    %10 = arith.addf %7, %9 : vector<8x16xf32>
    %c0_10 = arith.constant 0 : index
    %c0_11 = arith.constant 0 : index
    %11 = vector.load %arg2[%c0_10, %c0_11] : memref<8x16xf32, #tpu.memory_space<vmem>>, vector<8x16xf32>
    %cst_12 = arith.constant 5.000000e-01 : f32
    %12 = vector.broadcast %cst_12 : f32 to vector<8x16xf32>
    %13 = arith.mulf %12, %10 : vector<8x16xf32>
    %14 = math.exp %13 : vector<8x16xf32>
    %15 = arith.mulf %11, %14 : vector<8x16xf32>
    %16 = arith.addf %15, %5 : vector<8x16xf32>
    %c0_13 = arith.constant 0 : index
    %c0_14 = arith.constant 0 : index
    %17 = vector.load %arg7[%c0_13, %c0_14] : memref<16x32xf32, #tpu.memory_space<vmem>>, vector<16x32xf32>
    %cst_15 = arith.constant dense<0.000000e+00> : vector<8x32xf32>
    %18 = tpu.matmul %16, %17, %cst_15 {dimension_numbers = #tpu.dot_dimension_numbers<[1], [0], [0], [1], [0, 0, 1, 1], [], []>} : vector<8x16xf32>, vector<16x32xf32>, vector<8x32xf32> -> vector<8x32xf32>
    %cst_16 = arith.constant 0.000000e+00 : f32
    %19 = vector.broadcast %cst_16 : f32 to vector<8x32xf32>
    %20 = arith.maximumf %18, %19 : vector<8x32xf32>
    %c0_17 = arith.constant 0 : index
    %c0_18 = arith.constant 0 : index
    %21 = vector.load %arg8[%c0_17, %c0_18] : memref<32x32xf32, #tpu.memory_space<vmem>>, vector<32x32xf32>
    %cst_19 = arith.constant dense<0.000000e+00> : vector<8x32xf32>
    %22 = tpu.matmul %20, %21, %cst_19 {dimension_numbers = #tpu.dot_dimension_numbers<[1], [0], [0], [1], [0, 0, 1, 1], [], []>} : vector<8x32xf32>, vector<32x32xf32>, vector<8x32xf32> -> vector<8x32xf32>
    %cst_20 = arith.constant 0.000000e+00 : f32
    %23 = vector.broadcast %cst_20 : f32 to vector<8x32xf32>
    %24 = arith.maximumf %22, %23 : vector<8x32xf32>
    %c0_21 = arith.constant 0 : index
    %c0_22 = arith.constant 0 : index
    %25 = vector.load %arg9[%c0_21, %c0_22] : memref<32x16xf32, #tpu.memory_space<vmem>>, vector<32x16xf32>
    %cst_23 = arith.constant dense<0.000000e+00> : vector<8x16xf32>
    %26 = tpu.matmul %24, %25, %cst_23 {dimension_numbers = #tpu.dot_dimension_numbers<[1], [0], [0], [1], [0, 0, 1, 1], [], []>} : vector<8x32xf32>, vector<32x16xf32>, vector<8x16xf32> -> vector<8x16xf32>
    %27 = arith.addf %16, %26 : vector<8x16xf32>
    %c0_24 = arith.constant 0 : index
    %c0_25 = arith.constant 0 : index
    %28 = vector.load %arg10[%c0_24, %c0_25] : memref<8x16xf32, #tpu.memory_space<vmem>>, vector<8x16xf32>
    tpu.vector_store %arg10[%c0_24, %c0_25], %27 {strides = array<i32>} : memref<8x16xf32, #tpu.memory_space<vmem>>, vector<8x16xf32>,
    %c0_26 = arith.constant 0 : index
    %c0_27 = arith.constant 0 : index
    %29 = vector.load %arg11[%c0_26, %c0_27] : memref<8x16xf32, #tpu.memory_space<vmem>>, vector<8x16xf32>
    tpu.vector_store %arg11[%c0_26, %c0_27], %5 {strides = array<i32>} : memref<8x16xf32, #tpu.memory_space<vmem>>, vector<8x16xf32>,
    %c0_28 = arith.constant 0 : index
    %c0_29 = arith.constant 0 : index
    %30 = vector.load %arg12[%c0_28, %c0_29] : memref<8x16xf32, #tpu.memory_space<vmem>>, vector<8x16xf32>
    tpu.vector_store %arg12[%c0_28, %c0_29], %10 {strides = array<i32>} : memref<8x16xf32, #tpu.memory_space<vmem>>, vector<8x16xf32>,
    return
  }
  func.func @transform_0(%arg0: i32) -> (i32, i32) {
    %c0_i32 = arith.constant 0 : i32
    %c0_i32_0 = arith.constant 0 : i32
    return %arg0, %c0_i32 : i32, i32
  }
  func.func @transform_1(%arg0: i32) -> (i32, i32) {
    %c0_i32 = arith.constant 0 : i32
    %c0_i32_0 = arith.constant 0 : i32
    return %arg0, %c0_i32 : i32, i32
  }
  func.func @transform_2(%arg0: i32) -> (i32, i32) {
    %c0_i32 = arith.constant 0 : i32
    %c0_i32_0 = arith.constant 0 : i32
    %c0_i32_1 = arith.constant 0 : i32
    return %c0_i32, %c0_i32_0 : i32, i32
  }
  func.func @transform_3(%arg0: i32) -> (i32, i32) {
    %c0_i32 = arith.constant 0 : i32
    %c0_i32_0 = arith.constant 0 : i32
    %c0_i32_1 = arith.constant 0 : i32
    return %c0_i32, %c0_i32_0 : i32, i32
  }
  func.func @transform_4(%arg0: i32) -> (i32, i32) {
    %c0_i32 = arith.constant 0 : i32
    %c0_i32_0 = arith.constant 0 : i32
    %c0_i32_1 = arith.constant 0 : i32
    return %c0_i32, %c0_i32_0 : i32, i32
  }
  func.func @transform_5(%arg0: i32) -> (i32, i32) {
    %c0_i32 = arith.constant 0 : i32
    %c0_i32_0 = arith.constant 0 : i32
    %c0_i32_1 = arith.constant 0 : i32
    return %c0_i32, %c0_i32_0 : i32, i32
  }
  func.func @transform_6(%arg0: i32) -> (i32, i32) {
    %c0_i32 = arith.constant 0 : i32
    %c0_i32_0 = arith.constant 0 : i32
    %c0_i32_1 = arith.constant 0 : i32
    return %c0_i32, %c0_i32_0 : i32, i32
  }
  func.func @transform_7(%arg0: i32) -> (i32, i32) {
    %c0_i32 = arith.constant 0 : i32
    %c0_i32_0 = arith.constant 0 : i32
    %c0_i32_1 = arith.constant 0 : i32
    return %c0_i32, %c0_i32_0 : i32, i32
  }
  func.func @transform_8(%arg0: i32) -> (i32, i32) {
    %c0_i32 = arith.constant 0 : i32
    %c0_i32_0 = arith.constant 0 : i32
    %c0_i32_1 = arith.constant 0 : i32
    return %c0_i32, %c0_i32_0 : i32, i32
  }
  func.func @transform_9(%arg0: i32) -> (i32, i32) {
    %c0_i32 = arith.constant 0 : i32
    %c0_i32_0 = arith.constant 0 : i32
    return %arg0, %c0_i32 : i32, i32
  }
  func.func @transform_10(%arg0: i32) -> (i32, i32) {
    %c0_i32 = arith.constant 0 : i32
    %c0_i32_0 = arith.constant 0 : i32
    return %arg0, %c0_i32 : i32, i32
  }
  func.func @transform_11(%arg0: i32) -> (i32, i32) {
    %c0_i32 = arith.constant 0 : i32
    %c0_i32_0 = arith.constant 0 : i32
    return %arg0, %c0_i32 : i32, i32
  }
}

</mosaic_0001>

<llo_original>
// kernel: tpu_custom_call.1
$region0: #{tpu_custom_call.1}
  #allocation0 [shape = 'u32[]', space=smem, size = 0x4, offset = 0x4, fixed_abs, tag = 'smem constant byte address 0x4 - core index']
  #allocation1 [shape = 'u32[144,128]{1,0:T(1,128)}', space=vmem, size = 0x12000, scoped, tag = 'internal scratch']
  %s0 = inlined_call_operand.vmem [shape: f32[16,32], index: 0, kind: input, shape index: {}]
  %s1 = inlined_call_operand.vmem [shape: f32[16,16], index: 1, kind: input, shape index: {}]
  %s2 = inlined_call_operand.vmem [shape: f32[32,16], index: 2, kind: input, shape index: {}]
  %s3 = inlined_call_operand.vmem [shape: f32[32,16], index: 3, kind: input, shape index: {}]
  %s4 = inlined_call_operand.vmem [shape: f32[1,16], index: 4, kind: input, shape index: {}]
  %s5 = inlined_call_operand.vmem [shape: f32[1,16], index: 5, kind: input, shape index: {}]
  %s6 = inlined_call_operand.vmem [shape: f32[16,32], index: 6, kind: input, shape index: {}]
  %s7 = inlined_call_operand.vmem [shape: f32[32,32], index: 7, kind: input, shape index: {}]
  %s8 = inlined_call_operand.vmem [shape: f32[32,16], index: 8, kind: input, shape index: {}]
  %s9 = inlined_call_operand.hbm [shape: f32[16,16], index: 9, kind: output, shape index: {0}]
  %s10 = inlined_call_operand.hbm [shape: f32[16,16], index: 10, kind: output, shape index: {1}]
  %s11 = inlined_call_operand.hbm [shape: f32[16,16], index: 11, kind: output, shape index: {2}]
  %12 = xla_tuple %s9, %s10, %s11
  %s13 = sld [smem:[#allocation0]]
  $region85: #{tpu_custom_call.1} parent=0
    _
  %s15 = ssub.s32 1, %s13
  %s16 = scalar_select 0, %s15, %s13
  $region1: #{tpu_custom_call.1} parent=0
    #allocation2 [shape = 'u8[8192]{0}', space=vmem, size = 0x2000, scoped, tag = 'output window, operand 0']
    #allocation3 [shape = 's32[2]{0}', space=sflag, size = 0x8, scoped, tag = 'scoped memory for tpu_custom_call.1']
    #allocation4 [shape = 'u8[8192]{0}', space=vmem, size = 0x2000, scoped, tag = 'output window, operand 1']
    #allocation5 [shape = 's32[2]{0}', space=sflag, size = 0x8, scoped, tag = 'scoped memory for tpu_custom_call.1']
    #allocation6 [shape = 'u8[8192]{0}', space=vmem, size = 0x2000, scoped, tag = 'output window, operand 2']
    %17 = vsyncpa [#allocation3], 0
    %s18 = scalar_lea.sflag [#allocation3], 1
    %19 = vsyncpa %s18, 0
    %20 = vsyncpa [#allocation5], 0
    %s21 = scalar_lea.sflag [#allocation5], 1
    %22 = vsyncpa %s21, 0
    loop: start=0, step=1, limit=4
    $region2: #{tpu_custom_call.1} parent=1 // loop_pre_header
      _
    $region3: #{tpu_custom_call.1} parent=1 // loop_header
      %s24 = sphi 0, %s28
      %p25 = scmp.ge.s32.totalorder %s24, 4
      %s34 = sphi 0, %s36
      %s37 = sphi 0, %s34
      %s38 = sphi 0, %s37
      %s54 = sphi 0, %s38
      %s60 = sphi 0, %s62
      %s63 = sphi 0, %s60
      %s64 = sphi 0, %s63
      %s80 = sphi 0, %s64
      %s84 = sphi 0, %s84
      %s86 = sphi 0, %s84
      %s87 = sphi 0, %s86
      %s101 = sphi 0, %s87
      %s105 = sphi 0, %s105
      %s107 = sphi 0, %s105
      %s108 = sphi 0, %s107
      %s122 = sphi 0, %s108
      %s126 = sphi 0, %s126
      %s128 = sphi 0, %s126
      %s129 = sphi 0, %s128
      %s143 = sphi 0, %s129
      %s147 = sphi 0, %s147
      %s149 = sphi 0, %s147
      %s150 = sphi 0, %s149
      %s164 = sphi 0, %s150
      %s168 = sphi 0, %s168
      %s170 = sphi 0, %s168
      %s171 = sphi 0, %s170
      %s185 = sphi 0, %s171
      %s189 = sphi 0, %s189
      %s191 = sphi 0, %s189
      %s192 = sphi 0, %s191
      %s206 = sphi 0, %s192
      %s210 = sphi 0, %s210
      %s212 = sphi 0, %s210
      %s213 = sphi 0, %s212
      %s227 = sphi 0, %s213
      %s233 = sphi 0, %s235
      %s236 = sphi 0, %s233
      %s237 = sphi 0, %s236
      %s253 = sphi 0, %s237
      %s259 = sphi 0, %s261
      %s262 = sphi 0, %s259
      %s263 = sphi 0, %s262
      %s279 = sphi 0, %s263
      %s285 = sphi 0, %s287
      %s288 = sphi 0, %s285
      %s289 = sphi 0, %s288
      %s305 = sphi 0, %s289
    $region4: #{tpu_custom_call.1} parent=1 // loop_header_branch
      %27 = sbr.rel (%p25) target = $region8
    $region5: #{tpu_custom_call.1} parent=1 // loop_body
      %s29 = ssub.s32 %s24, 1
      %s30 = ssub.s32 %s24, 2
      %s31 = sadd.s32 %s24, 1
      %s32 = ssub.s32 %s24, %s31
      %p33 = scmp.eq.s32.totalorder %s32, 0
      %s35 = sadd.s32 %s34, 1
      %s36 = scalar_select %p33, %s34, %s35
      %p39 = pneg %p33
      %p40 = scmp.eq.s32.totalorder %s24, 1
      %p41 = por %p39, %p40
      %p42 = scmp.ne.s32.totalorder %s34, %s37
      %p43 = scmp.eq.s32.totalorder %s24, 0
      %p44 = por %p42, %p43
      %p45 = scmp.ne.s32.totalorder %s34, %s37
      %p46 = scmp.eq.s32.totalorder %s29, 1
      %p47 = por %p45, %p46
      %p48 = scmp.ne.s32.totalorder %s37, %s38
      %p49 = scmp.eq.s32.totalorder %s29, 0
      %p50 = por %p48, %p49
      %p51 = scmp.ne.s32.totalorder %s37, %s38
      %p52 = scmp.eq.s32.totalorder %s30, 1
      %p53 = por %p51, %p52
      %p55 = scmp.ne.s32.totalorder %s38, %s54
      %p56 = scmp.eq.s32.totalorder %s30, 0
      %p57 = por %p55, %p56
      %s58 = ssub.s32 %s24, %s31
      %p59 = scmp.eq.s32.totalorder %s58, 0
      %s61 = sadd.s32 %s60, 1
      %s62 = scalar_select %p59, %s60, %s61
      %p65 = pneg %p59
      %p66 = scmp.eq.s32.totalorder %s24, 1
      %p67 = por %p65, %p66
      %p68 = scmp.ne.s32.totalorder %s60, %s63
      %p69 = scmp.eq.s32.totalorder %s24, 0
      %p70 = por %p68, %p69
      %p71 = scmp.ne.s32.totalorder %s60, %s63
      %p72 = scmp.eq.s32.totalorder %s29, 1
      %p73 = por %p71, %p72
      %p74 = scmp.ne.s32.totalorder %s63, %s64
      %p75 = scmp.eq.s32.totalorder %s29, 0
      %p76 = por %p74, %p75
      %p77 = scmp.ne.s32.totalorder %s63, %s64
      %p78 = scmp.eq.s32.totalorder %s30, 1
      %p79 = por %p77, %p78
      %p81 = scmp.ne.s32.totalorder %s64, %s80
      %p82 = scmp.eq.s32.totalorder %s30, 0
      %p83 = por %p81, %p82
      %s85 = sadd.s32 %s84, 1
      %p88 = scmp.eq.s32.totalorder %s24, 1
      %p89 = scmp.ne.s32.totalorder %s84, %s86
      %p90 = scmp.eq.s32.totalorder %s24, 0
      %p91 = por %p89, %p90
      %p92 = scmp.ne.s32.totalorder %s84, %s86
      %p93 = scmp.eq.s32.totalorder %s29, 1
      %p94 = por %p92, %p93
      %p95 = scmp.ne.s32.totalorder %s86, %s87
      %p96 = scmp.eq.s32.totalorder %s29, 0
      %p97 = por %p95, %p96
      %p98 = scmp.ne.s32.totalorder %s86, %s87
      %p99 = scmp.eq.s32.totalorder %s30, 1
      %p100 = por %p98, %p99
      %p102 = scmp.ne.s32.totalorder %s87, %s101
      %p103 = scmp.eq.s32.totalorder %s30, 0
      %p104 = por %p102, %p103
      %s106 = sadd.s32 %s105, 1
      %p109 = scmp.eq.s32.totalorder %s24, 1
      %p110 = scmp.ne.s32.totalorder %s105, %s107
      %p111 = scmp.eq.s32.totalorder %s24, 0
      %p112 = por %p110, %p111
      %p113 = scmp.ne.s32.totalorder %s105, %s107
      %p114 = scmp.eq.s32.totalorder %s29, 1
      %p115 = por %p113, %p114
      %p116 = scmp.ne.s32.totalorder %s107, %s108
      %p117 = scmp.eq.s32.totalorder %s29, 0
      %p118 = por %p116, %p117
      %p119 = scmp.ne.s32.totalorder %s107, %s108
      %p120 = scmp.eq.s32.totalorder %s30, 1
      %p121 = por %p119, %p120
      %p123 = scmp.ne.s32.totalorder %s108, %s122
      %p124 = scmp.eq.s32.totalorder %s30, 0
      %p125 = por %p123, %p124
      %s127 = sadd.s32 %s126, 1
      %p130 = scmp.eq.s32.totalorder %s24, 1
      %p131 = scmp.ne.s32.totalorder %s126, %s128
      %p132 = scmp.eq.s32.totalorder %s24, 0
      %p133 = por %p131, %p132
      %p134 = scmp.ne.s32.totalorder %s126, %s128
      %p135 = scmp.eq.s32.totalorder %s29, 1
      %p136 = por %p134, %p135
      %p137 = scmp.ne.s32.totalorder %s128, %s129
      %p138 = scmp.eq.s32.totalorder %s29, 0
      %p139 = por %p137, %p138
      %p140 = scmp.ne.s32.totalorder %s128, %s129
      %p141 = scmp.eq.s32.totalorder %s30, 1
      %p142 = por %p140, %p141
      %p144 = scmp.ne.s32.totalorder %s129, %s143
      %p145 = scmp.eq.s32.totalorder %s30, 0
      %p146 = por %p144, %p145
      %s148 = sadd.s32 %s147, 1
      %p151 = scmp.eq.s32.totalorder %s24, 1
      %p152 = scmp.ne.s32.totalorder %s147, %s149
      %p153 = scmp.eq.s32.totalorder %s24, 0
      %p154 = por %p152, %p153
      %p155 = scmp.ne.s32.totalorder %s147, %s149
      %p156 = scmp.eq.s32.totalorder %s29, 1
      %p157 = por %p155, %p156
      %p158 = scmp.ne.s32.totalorder %s149, %s150
      %p159 = scmp.eq.s32.totalorder %s29, 0
      %p160 = por %p158, %p159
      %p161 = scmp.ne.s32.totalorder %s149, %s150
      %p162 = scmp.eq.s32.totalorder %s30, 1
      %p163 = por %p161, %p162
      %p165 = scmp.ne.s32.totalorder %s150, %s164
      %p166 = scmp.eq.s32.totalorder %s30, 0
      %p167 = por %p165, %p166
      %s169 = sadd.s32 %s168, 1
      %p172 = scmp.eq.s32.totalorder %s24, 1
      %p173 = scmp.ne.s32.totalorder %s168, %s170
      %p174 = scmp.eq.s32.totalorder %s24, 0
      %p175 = por %p173, %p174
      %p176 = scmp.ne.s32.totalorder %s168, %s170
      %p177 = scmp.eq.s32.totalorder %s29, 1
      %p178 = por %p176, %p177
      %p179 = scmp.ne.s32.totalorder %s170, %s171
      %p180 = scmp.eq.s32.totalorder %s29, 0
      %p181 = por %p179, %p180
      %p182 = scmp.ne.s32.totalorder %s170, %s171
      %p183 = scmp.eq.s32.totalorder %s30, 1
      %p184 = por %p182, %p183
      %p186 = scmp.ne.s32.totalorder %s171, %s185
      %p187 = scmp.eq.s32.totalorder %s30, 0
      %p188 = por %p186, %p187
      %s190 = sadd.s32 %s189, 1
      %p193 = scmp.eq.s32.totalorder %s24, 1
      %p194 = scmp.ne.s32.totalorder %s189, %s191
      %p195 = scmp.eq.s32.totalorder %s24, 0
      %p196 = por %p194, %p195
      %p197 = scmp.ne.s32.totalorder %s189, %s191
      %p198 = scmp.eq.s32.totalorder %s29, 1
      %p199 = por %p197, %p198
      %p200 = scmp.ne.s32.totalorder %s191, %s192
      %p201 = scmp.eq.s32.totalorder %s29, 0
      %p202 = por %p200, %p201
      %p203 = scmp.ne.s32.totalorder %s191, %s192
      %p204 = scmp.eq.s32.totalorder %s30, 1
      %p205 = por %p203, %p204
      %p207 = scmp.ne.s32.totalorder %s192, %s206
      %p208 = scmp.eq.s32.totalorder %s30, 0
      %p209 = por %p207, %p208
      %s211 = sadd.s32 %s210, 1
      %p214 = scmp.eq.s32.totalorder %s24, 1
      %p215 = scmp.ne.s32.totalorder %s210, %s212
      %p216 = scmp.eq.s32.totalorder %s24, 0
      %p217 = por %p215, %p216
      %p218 = scmp.ne.s32.totalorder %s210, %s212
      %p219 = scmp.eq.s32.totalorder %s29, 1
      %p220 = por %p218, %p219
      %p221 = scmp.ne.s32.totalorder %s212, %s213
      %p222 = scmp.eq.s32.totalorder %s29, 0
      %p223 = por %p221, %p222
      %p224 = scmp.ne.s32.totalorder %s212, %s213
      %p225 = scmp.eq.s32.totalorder %s30, 1
      %p226 = por %p224, %p225
      %p228 = scmp.ne.s32.totalorder %s213, %s227
      %p229 = scmp.eq.s32.totalorder %s30, 0
      %p230 = por %p228, %p229
      %s231 = ssub.s32 %s24, %s31
      %p232 = scmp.eq.s32.totalorder %s231, 0
      %s234 = sadd.s32 %s233, 1
      %s235 = scalar_select %p232, %s233, %s234
      %p238 = pneg %p232
      %p239 = scmp.eq.s32.totalorder %s24, 1
      %p240 = por %p238, %p239
      %p241 = scmp.ne.s32.totalorder %s233, %s236
      %p242 = scmp.eq.s32.totalorder %s24, 0
      %p243 = por %p241, %p242
      %p244 = scmp.ne.s32.totalorder %s233, %s236
      %p245 = scmp.eq.s32.totalorder %s29, 1
      %p246 = por %p244, %p245
      %p247 = scmp.ne.s32.totalorder %s236, %s237
      %p248 = scmp.eq.s32.totalorder %s29, 0
      %p249 = por %p247, %p248
      %p250 = scmp.ne.s32.totalorder %s236, %s237
      %p251 = scmp.eq.s32.totalorder %s30, 1
      %p252 = por %p250, %p251
      %p254 = scmp.ne.s32.totalorder %s237, %s253
      %p255 = scmp.eq.s32.totalorder %s30, 0
      %p256 = por %p254, %p255
      %s257 = ssub.s32 %s24, %s31
      %p258 = scmp.eq.s32.totalorder %s257, 0
      %s260 = sadd.s32 %s259, 1
      %s261 = scalar_select %p258, %s259, %s260
      %p264 = pneg %p258
      %p265 = scmp.eq.s32.totalorder %s24, 1
      %p266 = por %p264, %p265
      %p267 = scmp.ne.s32.totalorder %s259, %s262
      %p268 = scmp.eq.s32.totalorder %s24, 0
      %p269 = por %p267, %p268
      %p270 = scmp.ne.s32.totalorder %s259, %s262
      %p271 = scmp.eq.s32.totalorder %s29, 1
      %p272 = por %p270, %p271
      %p273 = scmp.ne.s32.totalorder %s262, %s263
      %p274 = scmp.eq.s32.totalorder %s29, 0
      %p275 = por %p273, %p274
      %p276 = scmp.ne.s32.totalorder %s262, %s263
      %p277 = scmp.eq.s32.totalorder %s30, 1
      %p278 = por %p276, %p277
      %p280 = scmp.ne.s32.totalorder %s263, %s279
      %p281 = scmp.eq.s32.totalorder %s30, 0
      %p282 = por %p280, %p281
      %s283 = ssub.s32 %s24, %s31
      %p284 = scmp.eq.s32.totalorder %s283, 0
      %s286 = sadd.s32 %s285, 1
      %s287 = scalar_select %p284, %s285, %s286
      %p290 = pneg %p284
      %p291 = scmp.eq.s32.totalorder %s24, 1
      %p292 = por %p290, %p291
      %p293 = scmp.ne.s32.totalorder %s285, %s288
      %p294 = scmp.eq.s32.totalorder %s24, 0
      %p295 = por %p293, %p294
      %p296 = scmp.ne.s32.totalorder %s285, %s288
      %p297 = scmp.eq.s32.totalorder %s29, 1
      %p298 = por %p296, %p297
      %p299 = scmp.ne.s32.totalorder %s288, %s289
      %p300 = scmp.eq.s32.totalorder %s29, 0
      %p301 = por %p299, %p300
      %p302 = scmp.ne.s32.totalorder %s288, %s289
      %p303 = scmp.eq.s32.totalorder %s30, 1
      %p304 = por %p302, %p303
      %p306 = scmp.ne.s32.totalorder %s289, %s305
      %p307 = scmp.eq.s32.totalorder %s30, 0
      %p308 = por %p306, %p307
      %p309 = scmp.le.s32.totalorder 1, %s24
      %p310 = scmp.lt.s32.totalorder %s24, 3
      %p311 = pnand %p309, %p310
      %p312 = pneg %p311
      // Predicated region
      $region9: #{tpu_custom_call.1} parent=5 // pred_check
        _
      $region10: #{tpu_custom_call.1} parent=5 // pred_check_branch
        %314 = sbr.rel (%p311) target = $region12
      $region11: #{tpu_custom_call.1} parent=5 // pred_region
        %s315 = ssub.s32 %s24, 1
        // Predicated region
        $region13: #{tpu_custom_call.1} parent=11 // pred_check
          %p316 = pneg %p97
        $region14: #{tpu_custom_call.1} parent=11 // pred_check_branch
          %318 = sbr.rel (%p316) target = $region16
        $region15: #{tpu_custom_call.1} parent=11 // pred_region
          _
        $region16: #{tpu_custom_call.1} parent=11 // pred_fallthru
          _
        // Predicated region
        $region17: #{tpu_custom_call.1} parent=11 // pred_check
          %p319 = pneg %p118
        $region18: #{tpu_custom_call.1} parent=11 // pred_check_branch
          %321 = sbr.rel (%p319) target = $region20
        $region19: #{tpu_custom_call.1} parent=11 // pred_region
          _
        $region20: #{tpu_custom_call.1} parent=11 // pred_fallthru
          _
        // Predicated region
        $region21: #{tpu_custom_call.1} parent=11 // pred_check
          %p322 = pneg %p139
        $region22: #{tpu_custom_call.1} parent=11 // pred_check_branch
          %324 = sbr.rel (%p322) target = $region24
        $region23: #{tpu_custom_call.1} parent=11 // pred_region
          _
        $region24: #{tpu_custom_call.1} parent=11 // pred_fallthru
          _
        // Predicated region
        $region25: #{tpu_custom_call.1} parent=11 // pred_check
          %p325 = pneg %p160
        $region26: #{tpu_custom_call.1} parent=11 // pred_check_branch
          %327 = sbr.rel (%p325) target = $region28
        $region27: #{tpu_custom_call.1} parent=11 // pred_region
          _
        $region28: #{tpu_custom_call.1} parent=11 // pred_fallthru
          _
        // Predicated region
        $region29: #{tpu_custom_call.1} parent=11 // pred_check
          %p328 = pneg %p181
        $region30: #{tpu_custom_call.1} parent=11 // pred_check_branch
          %330 = sbr.rel (%p328) target = $region32
        $region31: #{tpu_custom_call.1} parent=11 // pred_region
          _
        $region32: #{tpu_custom_call.1} parent=11 // pred_fallthru
          _
        // Predicated region
        $region33: #{tpu_custom_call.1} parent=11 // pred_check
          %p331 = pneg %p202
        $region34: #{tpu_custom_call.1} parent=11 // pred_check_branch
          %333 = sbr.rel (%p331) target = $region36
        $region35: #{tpu_custom_call.1} parent=11 // pred_region
          _
        $region36: #{tpu_custom_call.1} parent=11 // pred_fallthru
          _
        // Predicated region
        $region37: #{tpu_custom_call.1} parent=11 // pred_check
          %p334 = pneg %p223
        $region38: #{tpu_custom_call.1} parent=11 // pred_check_branch
          %336 = sbr.rel (%p334) target = $region40
        $region39: #{tpu_custom_call.1} parent=11 // pred_region
          _
        $region40: #{tpu_custom_call.1} parent=11 // pred_fallthru
          _
      $region12: #{tpu_custom_call.1} parent=5 // pred_fallthru
        _
      %p337 = scmp.lt.s32.totalorder %s24, 2
      // Predicated region
      $region41: #{tpu_custom_call.1} parent=5 // pred_check
        %p338 = pneg %p337
      $region42: #{tpu_custom_call.1} parent=5 // pred_check_branch
        %340 = sbr.rel (%p338) target = $region44
      $region43: #{tpu_custom_call.1} parent=5 // pred_region
        // Predicated region
        $region45: #{tpu_custom_call.1} parent=43 // pred_check
          %p341 = pneg %p44
        $region46: #{tpu_custom_call.1} parent=43 // pred_check_branch
          %343 = sbr.rel (%p341) target = $region48
        $region47: #{tpu_custom_call.1} parent=43 // pred_region
          %p344 = scmp.lt.s32.totalorder %s24, 1
          %s345 = scalar_select %p344, %s24, 1
          %s346 = smul.addr %s345, 8
          %s347 = scalar_lea.vmem %s0, %s346
        $region48: #{tpu_custom_call.1} parent=43 // pred_fallthru
          _
        // Predicated region
        $region49: #{tpu_custom_call.1} parent=43 // pred_check
          %p348 = pneg %p70
        $region50: #{tpu_custom_call.1} parent=43 // pred_check_branch
          %350 = sbr.rel (%p348) target = $region52
        $region51: #{tpu_custom_call.1} parent=43 // pred_region
          %p351 = scmp.lt.s32.totalorder %s24, 1
          %s352 = scalar_select %p351, %s24, 1
          %s353 = smul.addr %s352, 8
          %s354 = scalar_lea.vmem %s1, %s353
        $region52: #{tpu_custom_call.1} parent=43 // pred_fallthru
          _
      $region44: #{tpu_custom_call.1} parent=5 // pred_fallthru
        _
      %p355 = scmp.le.s32.totalorder 1, %s24
      %p356 = scmp.lt.s32.totalorder %s24, 3
      %p357 = pnand %p355, %p356
      %p358 = pneg %p357
      // Predicated region
      $region53: #{tpu_custom_call.1} parent=5 // pred_check
        _
      $region54: #{tpu_custom_call.1} parent=5 // pred_check_branch
        %360 = sbr.rel (%p357) target = $region56
      $region55: #{tpu_custom_call.1} parent=5 // pred_region
        %s361 = ssub.s32 %s24, 1
        %p362 = scmp.lt.s32.totalorder %s29, 1
        %s363 = scalar_select %p362, %s29, 1
        %s364 = smul.addr %s363, 8
        %s365 = scalar_lea.vmem %s0, %s364
        %p366 = pneg %p50
        %p367 = pneg %p47
        %p368 = scmp.lt.s32.totalorder %s29, 1
        %s369 = scalar_select %p368, %s29, 1
        %s370 = smul.addr %s369, 8
        %s371 = scalar_lea.vmem %s1, %s370
        %p372 = pneg %p76
        %p373 = pneg %p73
        %p374 = pneg %p97
        %p375 = pneg %p94
        %p376 = pneg %p118
        %p377 = pneg %p115
        %p378 = pneg %p139
        %p379 = pneg %p136
        %p380 = pneg %p160
        %p381 = pneg %p157
        %p382 = pneg %p181
        %p383 = pneg %p178
        %p384 = pneg %p202
        %p385 = pneg %p199
        %p386 = pneg %p223
        %p387 = pneg %p220
        %p388 = pneg %p249
        %p389 = pneg %p246
        %s390 = sand.u32 %s236, 1
        %s391 = scalar_lea.sflag [#allocation3], %s390
        %s392 = sand.u32 %s236, 1
        %s393 = smul.addr %s392, 8
        %s394 = scalar_lea.vmem [#allocation2], %s393
        %p395 = pneg %p275
        %p396 = pneg %p272
        %s397 = sand.u32 %s29, 1
        %s398 = scalar_lea.sflag [#allocation5], %s397
        %s399 = sand.u32 %s262, 1
        %s400 = smul.addr %s399, 8
        %s401 = scalar_lea.vmem [#allocation4], %s400
        %p402 = pneg %p301
        %p403 = pneg %p298
        %s404 = sand.u32 %s29, 1
        %s405 = scalar_lea.sflag [#allocation5], %s404
        %s406 = sand.u32 %s288, 1
        %s407 = smul.addr %s406, 8
        %s408 = scalar_lea.vmem [#allocation6], %s407
        %p409 = scmp.lt.s32.totalorder %s29, 1
        %s410 = scalar_select %p409, %s29, 1
        %s411 = smul.addr %s410, 8
        %s412 = scalar_lea.vmem %s0, %s411
        %p413 = scmp.lt.s32.totalorder %s29, 1
        %s414 = scalar_select %p413, %s29, 1
        %s415 = smul.addr %s414, 8
        %s416 = scalar_lea.vmem %s1, %s415
        %v417 = vld [vmem:[%s412] sm:$0xff]
        %v418 = vld [vmem:[%s2] sm:$0xff]
        %v419 = vld [vmem:[%s2 + $0x8] sm:$0xff]
        %v420 = vld [vmem:[%s2 + $0x10] sm:$0xff]
        %v421 = vld [vmem:[%s2 + $0x18] sm:$0xff]
        %v422 = vld [vmem:[%s4] sm:$0x1]
        %v424 = vlaneseq
        %v425 = vshrl.u32 %v424, 7
        %v426 = vsub.s32 0, %v425
        %v427 = vrot.slane %v422, %v426
        %vm429 = vcmask 261120
        %v431 = vsel %vm429, %v417, 0
        %433 = vmatprep.subr.mxu0 0.0
        %434 = vmatpush1.msra.mxu0 0.0
        %435 = vmatprep.subr.mxu0 0.0
        %436 = vmatpush1.msra.mxu0 0.0
        %437 = vmatprep.subr.mxu0 0.0
        %438 = vmatpush1.msra.mxu0 0.0
        %439 = vmatprep.subr.mxu0 0.0
        %440 = vmatpush1.msra.mxu0 0.0
        %441 = vmatprep.subr.mxu0 0.0
        %442 = vmatpush1.msra.mxu0 0.0
        %443 = vmatprep.subr.mxu0 0.0
        %444 = vmatpush1.msra.mxu0 0.0
        %445 = vmatprep.subr.mxu0 0.0
        %446 = vmatpush1.msra.mxu0 0.0
        %447 = vmatprep.subr.mxu0 0.0
        %448 = vmatpush1.msra.mxu0 0.0
        %449 = vmatprep.subr.mxu0 0.0
        %450 = vmatpush1.msra.mxu0 0.0
        %451 = vmatprep.subr.mxu0 0.0
        %452 = vmatpush1.msra.mxu0 0.0
        %453 = vmatprep.subr.mxu0 0.0
        %454 = vmatpush1.msra.mxu0 0.0
        %455 = vmatprep.subr.mxu0 0.0
        %456 = vmatpush1.msra.mxu0 0.0
        %457 = vmatprep.subr.mxu0 0.0
        %458 = vmatpush1.msra.mxu0 %v421
        %459 = vmatprep.subr.mxu0 0.0
        %460 = vmatpush1.msra.mxu0 %v420
        %461 = vmatprep.subr.mxu0 0.0
        %462 = vmatpush1.msra.mxu0 %v419
        %463 = vmatprep.subr.mxu0 0.0
        %464 = vmatpush1.msra.mxu0 %v418
        %465 = vmatprep.subr.mxu0 0.0
        %466 = vmatpush2.msra.mxu0 0.0
        %467 = vmatprep.subr.mxu0 0.0
        %468 = vmatpush2.msra.mxu0 0.0
        %469 = vmatprep.subr.mxu0 0.0
        %470 = vmatpush2.msra.mxu0 0.0
        %471 = vmatprep.subr.mxu0 0.0
        %472 = vmatpush2.msra.mxu0 0.0
        %473 = vmatprep.subr.mxu0 0.0
        %474 = vmatpush2.msra.mxu0 0.0
        %475 = vmatprep.subr.mxu0 0.0
        %476 = vmatpush2.msra.mxu0 0.0
        %477 = vmatprep.subr.mxu0 0.0
        %478 = vmatpush2.msra.mxu0 0.0
        %479 = vmatprep.subr.mxu0 0.0
        %480 = vmatpush2.msra.mxu0 0.0
        %481 = vmatprep.subr.mxu0 0.0
        %482 = vmatpush2.msra.mxu0 0.0
        %483 = vmatprep.subr.mxu0 0.0
        %484 = vmatpush2.msra.mxu0 0.0
        %485 = vmatprep.subr.mxu0 0.0
        %486 = vmatpush2.msra.mxu0 0.0
        %487 = vmatprep.subr.mxu0 0.0
        %488 = vmatpush2.msra.mxu0 0.0
        %489 = vmatprep.subr.mxu0 0.0
        %490 = vmatpush2.msra.mxu0 0.0
        %491 = vmatprep.subr.mxu0 0.0
        %492 = vmatpush2.msra.mxu0 0.0
        %493 = vmatprep.subr.mxu0 0.0
        %494 = vmatpush2.msra.mxu0 0.0
        %495 = vmatprep.subr.mxu0 0.0
        %496 = vmatpush2.msra.mxu0 0.0
        %497 = vmatprep.mubr.f32.mxu0 0.0
        %498 = vmatmul.mubr.f32.gmra.mxu0 %v431
        %v499 = vpop.f32.mrf.mxu0
        %v500 = vadd.f32 %v427, %v499
        %v501 = vpop.f32.mrf.mxu0
        %502 = vdwg.mxu0
        %v503 = vld [vmem:[%s3] sm:$0xff]
        %v504 = vld [vmem:[%s3 + $0x8] sm:$0xff]
        %v505 = vld [vmem:[%s3 + $0x10] sm:$0xff]
        %v506 = vld [vmem:[%s3 + $0x18] sm:$0xff]
        %v507 = vld [vmem:[%s5] sm:$0x1]
        %v509 = vlaneseq
        %v510 = vshrl.u32 %v509, 7
        %v511 = vsub.s32 0, %v510
        %v512 = vrot.slane %v507, %v511
        %514 = vmatprep.subr.mxu0 0.0
        %515 = vmatpush1.msra.mxu0 0.0
        %516 = vmatprep.subr.mxu0 0.0
        %517 = vmatpush1.msra.mxu0 0.0
        %518 = vmatprep.subr.mxu0 0.0
        %519 = vmatpush1.msra.mxu0 0.0
        %520 = vmatprep.subr.mxu0 0.0
        %521 = vmatpush1.msra.mxu0 0.0
        %522 = vmatprep.subr.mxu0 0.0
        %523 = vmatpush1.msra.mxu0 0.0
        %524 = vmatprep.subr.mxu0 0.0
        %525 = vmatpush1.msra.mxu0 0.0
        %526 = vmatprep.subr.mxu0 0.0
        %527 = vmatpush1.msra.mxu0 0.0
        %528 = vmatprep.subr.mxu0 0.0
        %529 = vmatpush1.msra.mxu0 0.0
        %530 = vmatprep.subr.mxu0 0.0
        %531 = vmatpush1.msra.mxu0 0.0
        %532 = vmatprep.subr.mxu0 0.0
        %533 = vmatpush1.msra.mxu0 0.0
        %534 = vmatprep.subr.mxu0 0.0
        %535 = vmatpush1.msra.mxu0 0.0
        %536 = vmatprep.subr.mxu0 0.0
        %537 = vmatpush1.msra.mxu0 0.0
        %538 = vmatprep.subr.mxu0 0.0
        %539 = vmatpush1.msra.mxu0 %v506
        %540 = vmatprep.subr.mxu0 0.0
        %541 = vmatpush1.msra.mxu0 %v505
        %542 = vmatprep.subr.mxu0 0.0
        %543 = vmatpush1.msra.mxu0 %v504
        %544 = vmatprep.subr.mxu0 0.0
        %545 = vmatpush1.msra.mxu0 %v503
        %546 = vmatprep.subr.mxu0 0.0
        %547 = vmatpush2.msra.mxu0 0.0
        %548 = vmatprep.subr.mxu0 0.0
        %549 = vmatpush2.msra.mxu0 0.0
        %550 = vmatprep.subr.mxu0 0.0
        %551 = vmatpush2.msra.mxu0 0.0
        %552 = vmatprep.subr.mxu0 0.0
        %553 = vmatpush2.msra.mxu0 0.0
        %554 = vmatprep.subr.mxu0 0.0
        %555 = vmatpush2.msra.mxu0 0.0
        %556 = vmatprep.subr.mxu0 0.0
        %557 = vmatpush2.msra.mxu0 0.0
        %558 = vmatprep.subr.mxu0 0.0
        %559 = vmatpush2.msra.mxu0 0.0
        %560 = vmatprep.subr.mxu0 0.0
        %561 = vmatpush2.msra.mxu0 0.0
        %562 = vmatprep.subr.mxu0 0.0
        %563 = vmatpush2.msra.mxu0 0.0
        %564 = vmatprep.subr.mxu0 0.0
        %565 = vmatpush2.msra.mxu0 0.0
        %566 = vmatprep.subr.mxu0 0.0
        %567 = vmatpush2.msra.mxu0 0.0
        %568 = vmatprep.subr.mxu0 0.0
        %569 = vmatpush2.msra.mxu0 0.0
        %570 = vmatprep.subr.mxu0 0.0
        %571 = vmatpush2.msra.mxu0 0.0
        %572 = vmatprep.subr.mxu0 0.0
        %573 = vmatpush2.msra.mxu0 0.0
        %574 = vmatprep.subr.mxu0 0.0
        %575 = vmatpush2.msra.mxu0 0.0
        %576 = vmatprep.subr.mxu0 0.0
        %577 = vmatpush2.msra.mxu0 0.0
        %578 = vmatprep.mubr.f32.mxu0 0.0
        %579 = vmatmul.mubr.f32.gmra.mxu0 %v431
        %v580 = vpop.f32.mrf.mxu0
        %v581 = vadd.f32 %v512, %v580
        %v582 = vpop.f32.mrf.mxu0
        %583 = vdwg.mxu0
        %v584 = vld [vmem:[%s416] sm:$0xff]
        %v585 = vmul.f32 %v581, 0.5
        %v586 = vmul.f32 %v585, 1.442695
        %v587 = vpow.pop %v586
        %v588 = vmul.f32 %v584, %v587
        %v589 = vadd.f32 %v588, %v500
        %v590 = vld [vmem:[%s6] sm:$0xff]
        %v591 = vld [vmem:[%s6 + $0x8] sm:$0xff]
        %vm592 = vcmask 130048
        %v594 = vsel %vm592, %v589, 0
        %596 = vmatprep.subr.mxu0 0.0
        %597 = vmatpush1.msra.mxu0 0.0
        %598 = vmatprep.subr.mxu0 0.0
        %599 = vmatpush1.msra.mxu0 0.0
        %600 = vmatprep.subr.mxu0 0.0
        %601 = vmatpush1.msra.mxu0 0.0
        %602 = vmatprep.subr.mxu0 0.0
        %603 = vmatpush1.msra.mxu0 0.0
        %604 = vmatprep.subr.mxu0 0.0
        %605 = vmatpush1.msra.mxu0 0.0
        %606 = vmatprep.subr.mxu0 0.0
        %607 = vmatpush1.msra.mxu0 0.0
        %608 = vmatprep.subr.mxu0 0.0
        %609 = vmatpush1.msra.mxu0 0.0
        %610 = vmatprep.subr.mxu0 0.0
        %611 = vmatpush1.msra.mxu0 0.0
        %612 = vmatprep.subr.mxu0 0.0
        %613 = vmatpush1.msra.mxu0 0.0
        %614 = vmatprep.subr.mxu0 0.0
        %615 = vmatpush1.msra.mxu0 0.0
        %616 = vmatprep.subr.mxu0 0.0
        %617 = vmatpush1.msra.mxu0 0.0
        %618 = vmatprep.subr.mxu0 0.0
        %619 = vmatpush1.msra.mxu0 0.0
        %620 = vmatprep.subr.mxu0 0.0
        %621 = vmatpush1.msra.mxu0 0.0
        %622 = vmatprep.subr.mxu0 0.0
        %623 = vmatpush1.msra.mxu0 0.0
        %624 = vmatprep.subr.mxu0 0.0
        %625 = vmatpush1.msra.mxu0 %v591
        %626 = vmatprep.subr.mxu0 0.0
        %627 = vmatpush1.msra.mxu0 %v590
        %628 = vmatprep.subr.mxu0 0.0
        %629 = vmatpush2.msra.mxu0 0.0
        %630 = vmatprep.subr.mxu0 0.0
        %631 = vmatpush2.msra.mxu0 0.0
        %632 = vmatprep.subr.mxu0 0.0
        %633 = vmatpush2.msra.mxu0 0.0
        %634 = vmatprep.subr.mxu0 0.0
        %635 = vmatpush2.msra.mxu0 0.0
        %636 = vmatprep.subr.mxu0 0.0
        %637 = vmatpush2.msra.mxu0 0.0
        %638 = vmatprep.subr.mxu0 0.0
        %639 = vmatpush2.msra.mxu0 0.0
        %640 = vmatprep.subr.mxu0 0.0
        %641 = vmatpush2.msra.mxu0 0.0
        %642 = vmatprep.subr.mxu0 0.0
        %643 = vmatpush2.msra.mxu0 0.0
        %644 = vmatprep.subr.mxu0 0.0
        %645 = vmatpush2.msra.mxu0 0.0
        %646 = vmatprep.subr.mxu0 0.0
        %647 = vmatpush2.msra.mxu0 0.0
        %648 = vmatprep.subr.mxu0 0.0
        %649 = vmatpush2.msra.mxu0 0.0
        %650 = vmatprep.subr.mxu0 0.0
        %651 = vmatpush2.msra.mxu0 0.0
        %652 = vmatprep.subr.mxu0 0.0
        %653 = vmatpush2.msra.mxu0 0.0
        %654 = vmatprep.subr.mxu0 0.0
        %655 = vmatpush2.msra.mxu0 0.0
        %656 = vmatprep.subr.mxu0 0.0
        %657 = vmatpush2.msra.mxu0 0.0
        %658 = vmatprep.subr.mxu0 0.0
        %659 = vmatpush2.msra.mxu0 0.0
        %660 = vmatprep.mubr.f32.mxu0 0.0
        %661 = vmatmul.mubr.f32.gmra.mxu0 %v594
        %v662 = vpop.f32.mrf.mxu0
        %v663 = vadd.f32 0.0, %v662
        %v664 = vpop.f32.mrf.mxu0
        %665 = vdwg.mxu0
        %v666 = vmax.f32 %v663, 0.0
        %v667 = vld [vmem:[%s7] sm:$0xff]
        %v668 = vld [vmem:[%s7 + $0x8] sm:$0xff]
        %v669 = vld [vmem:[%s7 + $0x10] sm:$0xff]
        %v670 = vld [vmem:[%s7 + $0x18] sm:$0xff]
        %v672 = vsel %vm429, %v666, 0
        %674 = vmatprep.subr.mxu0 0.0
        %675 = vmatpush1.msra.mxu0 0.0
        %676 = vmatprep.subr.mxu0 0.0
        %677 = vmatpush1.msra.mxu0 0.0
        %678 = vmatprep.subr.mxu0 0.0
        %679 = vmatpush1.msra.mxu0 0.0
        %680 = vmatprep.subr.mxu0 0.0
        %681 = vmatpush1.msra.mxu0 0.0
        %682 = vmatprep.subr.mxu0 0.0
        %683 = vmatpush1.msra.mxu0 0.0
        %684 = vmatprep.subr.mxu0 0.0
        %685 = vmatpush1.msra.mxu0 0.0
        %686 = vmatprep.subr.mxu0 0.0
        %687 = vmatpush1.msra.mxu0 0.0
        %688 = vmatprep.subr.mxu0 0.0
        %689 = vmatpush1.msra.mxu0 0.0
        %690 = vmatprep.subr.mxu0 0.0
        %691 = vmatpush1.msra.mxu0 0.0
        %692 = vmatprep.subr.mxu0 0.0
        %693 = vmatpush1.msra.mxu0 0.0
        %694 = vmatprep.subr.mxu0 0.0
        %695 = vmatpush1.msra.mxu0 0.0
        %696 = vmatprep.subr.mxu0 0.0
        %697 = vmatpush1.msra.mxu0 0.0
        %698 = vmatprep.subr.mxu0 0.0
        %699 = vmatpush1.msra.mxu0 %v670
        %700 = vmatprep.subr.mxu0 0.0
        %701 = vmatpush1.msra.mxu0 %v669
        %702 = vmatprep.subr.mxu0 0.0
        %703 = vmatpush1.msra.mxu0 %v668
        %704 = vmatprep.subr.mxu0 0.0
        %705 = vmatpush1.msra.mxu0 %v667
        %706 = vmatprep.subr.mxu0 0.0
        %707 = vmatpush2.msra.mxu0 0.0
        %708 = vmatprep.subr.mxu0 0.0
        %709 = vmatpush2.msra.mxu0 0.0
        %710 = vmatprep.subr.mxu0 0.0
        %711 = vmatpush2.msra.mxu0 0.0
        %712 = vmatprep.subr.mxu0 0.0
        %713 = vmatpush2.msra.mxu0 0.0
        %714 = vmatprep.subr.mxu0 0.0
        %715 = vmatpush2.msra.mxu0 0.0
        %716 = vmatprep.subr.mxu0 0.0
        %717 = vmatpush2.msra.mxu0 0.0
        %718 = vmatprep.subr.mxu0 0.0
        %719 = vmatpush2.msra.mxu0 0.0
        %720 = vmatprep.subr.mxu0 0.0
        %721 = vmatpush2.msra.mxu0 0.0
        %722 = vmatprep.subr.mxu0 0.0
        %723 = vmatpush2.msra.mxu0 0.0
        %724 = vmatprep.subr.mxu0 0.0
        %725 = vmatpush2.msra.mxu0 0.0
        %726 = vmatprep.subr.mxu0 0.0
        %727 = vmatpush2.msra.mxu0 0.0
        %728 = vmatprep.subr.mxu0 0.0
        %729 = vmatpush2.msra.mxu0 0.0
        %730 = vmatprep.subr.mxu0 0.0
        %731 = vmatpush2.msra.mxu0 0.0
        %732 = vmatprep.subr.mxu0 0.0
        %733 = vmatpush2.msra.mxu0 0.0
        %734 = vmatprep.subr.mxu0 0.0
        %735 = vmatpush2.msra.mxu0 0.0
        %736 = vmatprep.subr.mxu0 0.0
        %737 = vmatpush2.msra.mxu0 0.0
        %738 = vmatprep.mubr.f32.mxu0 0.0
        %739 = vmatmul.mubr.f32.gmra.mxu0 %v672
        %v740 = vpop.f32.mrf.mxu0
        %v741 = vadd.f32 0.0, %v740
        %v742 = vpop.f32.mrf.mxu0
        %743 = vdwg.mxu0
        %v744 = vmax.f32 %v741, 0.0
        %v745 = vld [vmem:[%s8] sm:$0xff]
        %v746 = vld [vmem:[%s8 + $0x8] sm:$0xff]
        %v747 = vld [vmem:[%s8 + $0x10] sm:$0xff]
        %v748 = vld [vmem:[%s8 + $0x18] sm:$0xff]
        %v750 = vsel %vm429, %v744, 0
        %752 = vmatprep.subr.mxu0 0.0
        %753 = vmatpush1.msra.mxu0 0.0
        %754 = vmatprep.subr.mxu0 0.0
        %755 = vmatpush1.msra.mxu0 0.0
        %756 = vmatprep.subr.mxu0 0.0
        %757 = vmatpush1.msra.mxu0 0.0
        %758 = vmatprep.subr.mxu0 0.0
        %759 = vmatpush1.msra.mxu0 0.0
        %760 = vmatprep.subr.mxu0 0.0
        %761 = vmatpush1.msra.mxu0 0.0
        %762 = vmatprep.subr.mxu0 0.0
        %763 = vmatpush1.msra.mxu0 0.0
        %764 = vmatprep.subr.mxu0 0.0
        %765 = vmatpush1.msra.mxu0 0.0
        %766 = vmatprep.subr.mxu0 0.0
        %767 = vmatpush1.msra.mxu0 0.0
        %768 = vmatprep.subr.mxu0 0.0
        %769 = vmatpush1.msra.mxu0 0.0
        %770 = vmatprep.subr.mxu0 0.0
        %771 = vmatpush1.msra.mxu0 0.0
        %772 = vmatprep.subr.mxu0 0.0
        %773 = vmatpush1.msra.mxu0 0.0
        %774 = vmatprep.subr.mxu0 0.0
        %775 = vmatpush1.msra.mxu0 0.0
        %776 = vmatprep.subr.mxu0 0.0
        %777 = vmatpush1.msra.mxu0 %v748
        %778 = vmatprep.subr.mxu0 0.0
        %779 = vmatpush1.msra.mxu0 %v747
        %780 = vmatprep.subr.mxu0 0.0
        %781 = vmatpush1.msra.mxu0 %v746
        %782 = vmatprep.subr.mxu0 0.0
        %783 = vmatpush1.msra.mxu0 %v745
        %784 = vmatprep.subr.mxu0 0.0
        %785 = vmatpush2.msra.mxu0 0.0
        %786 = vmatprep.subr.mxu0 0.0
        %787 = vmatpush2.msra.mxu0 0.0
        %788 = vmatprep.subr.mxu0 0.0
        %789 = vmatpush2.msra.mxu0 0.0
        %790 = vmatprep.subr.mxu0 0.0
        %791 = vmatpush2.msra.mxu0 0.0
        %792 = vmatprep.subr.mxu0 0.0
        %793 = vmatpush2.msra.mxu0 0.0
        %794 = vmatprep.subr.mxu0 0.0
        %795 = vmatpush2.msra.mxu0 0.0
        %796 = vmatprep.subr.mxu0 0.0
        %797 = vmatpush2.msra.mxu0 0.0
        %798 = vmatprep.subr.mxu0 0.0
        %799 = vmatpush2.msra.mxu0 0.0
        %800 = vmatprep.subr.mxu0 0.0
        %801 = vmatpush2.msra.mxu0 0.0
        %802 = vmatprep.subr.mxu0 0.0
        %803 = vmatpush2.msra.mxu0 0.0
        %804 = vmatprep.subr.mxu0 0.0
        %805 = vmatpush2.msra.mxu0 0.0
        %806 = vmatprep.subr.mxu0 0.0
        %807 = vmatpush2.msra.mxu0 0.0
        %808 = vmatprep.subr.mxu0 0.0
        %809 = vmatpush2.msra.mxu0 0.0
        %810 = vmatprep.subr.mxu0 0.0
        %811 = vmatpush2.msra.mxu0 0.0
        %812 = vmatprep.subr.mxu0 0.0
        %813 = vmatpush2.msra.mxu0 0.0
        %814 = vmatprep.subr.mxu0 0.0
        %815 = vmatpush2.msra.mxu0 0.0
        %816 = vmatprep.mubr.f32.mxu0 0.0
        %817 = vmatmul.mubr.f32.gmra.mxu0 %v750
        %v818 = vpop.f32.mrf.mxu0
        %v819 = vadd.f32 0.0, %v818
        %v820 = vpop.f32.mrf.mxu0
        %821 = vdwg.mxu0
        %v822 = vadd.f32 %v589, %v819
        %823 = vst.msk [vmem:[%s394] sm:$0xff] %vm592, %v822
        %824 = vst.msk [vmem:[%s401] sm:$0xff] %vm592, %v500
        %825 = vst.msk [vmem:[%s408] sm:$0xff] %vm592, %v581
        %s826 = sand.u32 %s236, 1
        %s827 = scalar_lea.sflag [#allocation3], %s826
        %s828 = sand.u32 %s236, 1
        %s829 = smul.addr %s828, 8
        %s830 = scalar_lea.vmem [#allocation2], %s829
        %s831 = sand.u32 %s29, 1
        %s832 = scalar_lea.sflag [#allocation5], %s831
        %s833 = sand.u32 %s262, 1
        %s834 = smul.addr %s833, 8
        %s835 = scalar_lea.vmem [#allocation4], %s834
        %s836 = sand.u32 %s29, 1
        %s837 = scalar_lea.sflag [#allocation5], %s836
        %s838 = sand.u32 %s288, 1
        %s839 = smul.addr %s838, 8
        %s840 = scalar_lea.vmem [#allocation6], %s839
        // Predicated region
        $region57: #{tpu_custom_call.1} parent=55 // pred_check
          %p841 = pneg %p246
        $region58: #{tpu_custom_call.1} parent=55 // pred_check_branch
          %843 = sbr.rel (%p841) target = $region60
        $region59: #{tpu_custom_call.1} parent=55 // pred_region
          %s845 = ssub.s32 128, 128
          %846 = vsyncadd %s827, %s845
          %s847 = smul.addr %s29, 128
          %s848 = scalar_lea.hbm %s9, %s847
          %s850 = sshll.u32 %s830, 4
          %s851 = int_to_ptr.vmem [resolvable:$true] %s850
          %853 = dma.vmem_to_hbm [thread:$0]  %s851, 128, %s848, %s827
        $region60: #{tpu_custom_call.1} parent=55 // pred_fallthru
          _
        // Predicated region
        $region61: #{tpu_custom_call.1} parent=55 // pred_check
          %p854 = pneg %p272
        $region62: #{tpu_custom_call.1} parent=55 // pred_check_branch
          %856 = sbr.rel (%p854) target = $region64
        $region63: #{tpu_custom_call.1} parent=55 // pred_region
          %s858 = ssub.s32 128, 128
          %859 = vsyncadd %s832, %s858
          %s860 = smul.addr %s29, 128
          %s861 = scalar_lea.hbm %s10, %s860
          %s863 = sshll.u32 %s835, 4
          %s864 = int_to_ptr.vmem [resolvable:$true] %s863
          %866 = dma.vmem_to_hbm [thread:$0]  %s864, 128, %s861, %s832
        $region64: #{tpu_custom_call.1} parent=55 // pred_fallthru
          _
        // Predicated region
        $region65: #{tpu_custom_call.1} parent=55 // pred_check
          %p867 = pneg %p298
        $region66: #{tpu_custom_call.1} parent=55 // pred_check_branch
          %869 = sbr.rel (%p867) target = $region68
        $region67: #{tpu_custom_call.1} parent=55 // pred_region
          %s871 = ssub.s32 128, 128
          %872 = vsyncadd %s837, %s871
          %s873 = smul.addr %s29, 128
          %s874 = scalar_lea.hbm %s11, %s873
          %s876 = sshll.u32 %s840, 4
          %s877 = int_to_ptr.vmem [resolvable:$true] %s876
          %879 = dma.vmem_to_hbm [thread:$0]  %s877, 128, %s874, %s837
        $region68: #{tpu_custom_call.1} parent=55 // pred_fallthru
          _
      $region56: #{tpu_custom_call.1} parent=5 // pred_fallthru
        _
      %p880 = scmp.le.s32.totalorder 2, %s24
      // Predicated region
      $region69: #{tpu_custom_call.1} parent=5 // pred_check
        %p881 = pneg %p880
      $region70: #{tpu_custom_call.1} parent=5 // pred_check_branch
        %883 = sbr.rel (%p881) target = $region72
      $region71: #{tpu_custom_call.1} parent=5 // pred_region
        %s884 = ssub.s32 %s24, 2
        // Predicated region
        $region73: #{tpu_custom_call.1} parent=71 // pred_check
          %p885 = pneg %p252
        $region74: #{tpu_custom_call.1} parent=71 // pred_check_branch
          %887 = sbr.rel (%p885) target = $region76
        $region75: #{tpu_custom_call.1} parent=71 // pred_region
          %s888 = sand.u32 %s237, 1
          %s889 = scalar_lea.sflag [#allocation3], %s888
          %s890 = sand.u32 %s237, 1
          %s891 = smul.addr %s890, 8
          %s892 = scalar_lea.vmem [#allocation2], %s891
          %893 = dma.done %s889, 128
        $region76: #{tpu_custom_call.1} parent=71 // pred_fallthru
          _
        // Predicated region
        $region77: #{tpu_custom_call.1} parent=71 // pred_check
          %p894 = pneg %p278
        $region78: #{tpu_custom_call.1} parent=71 // pred_check_branch
          %896 = sbr.rel (%p894) target = $region80
        $region79: #{tpu_custom_call.1} parent=71 // pred_region
          %s897 = sand.u32 %s30, 1
          %s898 = scalar_lea.sflag [#allocation5], %s897
          %s899 = sand.u32 %s263, 1
          %s900 = smul.addr %s899, 8
          %s901 = scalar_lea.vmem [#allocation4], %s900
          %902 = dma.done %s898, 128
        $region80: #{tpu_custom_call.1} parent=71 // pred_fallthru
          _
        // Predicated region
        $region81: #{tpu_custom_call.1} parent=71 // pred_check
          %p903 = pneg %p304
        $region82: #{tpu_custom_call.1} parent=71 // pred_check_branch
          %905 = sbr.rel (%p903) target = $region84
        $region83: #{tpu_custom_call.1} parent=71 // pred_region
          %s906 = sand.u32 %s30, 1
          %s907 = scalar_lea.sflag [#allocation5], %s906
          %s908 = sand.u32 %s289, 1
          %s909 = smul.addr %s908, 8
          %s910 = scalar_lea.vmem [#allocation6], %s909
          %911 = dma.done %s907, 128
        $region84: #{tpu_custom_call.1} parent=71 // pred_fallthru
          _
      $region72: #{tpu_custom_call.1} parent=5 // pred_fallthru
        _
    $region6: #{tpu_custom_call.1} parent=1 // loop_footer
      %s28 = sadd.s32 1, %s24
    $region7: #{tpu_custom_call.1} parent=1 // loop_footer_branch
      %23 = sbr.rel target = $region3
    $region8: #{tpu_custom_call.1} parent=1 // loop_exit
      _
    %912 = vsyncpa [#allocation3], 1
    %s913 = scalar_lea.sflag [#allocation3], 1
    %914 = vsyncpa %s913, 1
    %915 = vsyncpa [#allocation5], 1
    %s916 = scalar_lea.sflag [#allocation5], 1
    %917 = vsyncpa %s916, 1

</llo_original>
